<compile_context>
chip_gen: v5e
topology: v5e:2x2
jax: 0.10.0
libtpu: 0.0.40
codegen_flags: <defaults>
</compile_context>

<pallas_src>
import functools
import inspect
import math

import jax
import jax.numpy as jnp
from jax.experimental import pallas as pl
from jax.experimental.pallas import tpu as pltpu


def _single_buffer_supported():
    """Static capability check for pipeline_mode=pl.Buffered(1)."""
    if not hasattr(pl, "Buffered"):
        return False
    try:
        return "pipeline_mode" in inspect.signature(pl.BlockSpec).parameters
    except (TypeError, ValueError):
        return True   # Buffered exists but BlockSpec is not introspectable


_SINGLE_BUFFER_OK = _single_buffer_supported()


def _tpu_vmem_and_cores():
    """Best-effort hardware query; conservative defaults if unavailable."""
    vmem_cap, num_cores = 128 * 1024 * 1024, 1
    if hasattr(pltpu, "get_tpu_info"):
        try:
            info = pltpu.get_tpu_info()
            vmem_cap = int(getattr(info, "vmem_capacity_bytes", None) or vmem_cap)
            num_cores = int(getattr(info, "num_cores", None)
                            or getattr(info, "num_tensorcores", None)
                            or num_cores)
        except Exception:
            # Hardware-info query only; kernel/lowering errors are never caught.
            pass
    return vmem_cap, num_cores


def _graph_filter_kernel(*refs, order, tap_width, use_activation, add_bias):
    """One grid step == one lane-dense batch tile.

    refs (in order):
      [bias_ref] : SMEM (1,)                   hoisted sum_k bias[k] (only if add_bias)
      s_ref      : VMEM (N, N)                 graph shift operator (constant block)
      x_ref      : VMEM (N, Bt*F_in)           batch tile of X, batch folded into lanes
      c_ref      : VMEM (K*Bt*F_in, Bt*F_out)  kron(I_Bt, Theta_k) stacked over k
      o_ref      : VMEM (N, Bt*F_out)          lane-dense output slab
    """
    if add_bias:
        bias_ref, s_ref, x_ref, c_ref, o_ref = refs
    else:
        s_ref, x_ref, c_ref, o_ref = refs

    s = s_ref[...]
    z = x_ref[...]

    # Tap 0 straight from the input tile (no staging copy); every later tap is
    # accumulated into the f32 result as soon as the diffusion chain produces
    # it (per-tap acc += dot maps onto v7x's MRB in-place accumulation).
    acc = jnp.dot(z, c_ref[0:tap_width, :], preferred_element_type=jnp.float32)
    for k in range(1, order):                          # static, tiny, unrolled
        # Z_k = S @ Z_{k-1}: one dense MXU GEMM shared by the whole batch tile.
        z = jnp.dot(s, z, preferred_element_type=jnp.float32).astype(z.dtype)
        acc = acc + jnp.dot(z, c_ref[k * tap_width:(k + 1) * tap_width, :],
                            preferred_element_type=jnp.float32)

    if add_bias:
        acc = acc + bias_ref[0]                        # hoisted sum_k bias[k]
    if use_activation:
        acc = jnp.maximum(acc, 0.0)                    # ReLU
    o_ref[...] = acc.astype(o_ref.dtype)


def _pick_batch_tile(batch, n_nodes, f_in, f_out, order, *, vmem_budget,
                     prefer_multi_tile, lane_target=512):
    """Choose the per-step batch tile Bt (Bt | batch).

    Constraints:
      * lane alignment: partial tiles need Bt*F_in and Bt*F_out % 128 == 0
        (full-batch tiles are always legal: block == full array);
      * VMEM budget for S + kron coefficients + double-buffered X/out tiles;
      * kron zero-inflation cap: executed mix FLOPs <= S-chain FLOPs, i.e.
        Bt <= (K-1)*N/(K*F_out);
      * on multi-TensorCore parts prefer >=2 grid steps ('parallel' axis).
    """
    def aligned(bt):
        if bt == batch:
            return True
        return (bt * f_in) % 128 == 0 and (bt * f_out) % 128 == 0

    def vmem_ok(bt):
        tap_w, out_w = bt * f_in, bt * f_out
        need = 4 * (n_nodes * n_nodes            # S (single-buffered)
                    + order * tap_w * out_w      # kron coefficients
                    + 2 * n_nodes * tap_w        # X tile (double buffer)
                    + 2 * n_nodes * out_w)       # output tile (double buffer)
        return need <= vmem_budget

    infl_cap = (batch if order <= 1
                else max(1, ((order - 1) * n_nodes) // (order * f_out)))

    divisors = [d for d in range(batch, 0, -1) if batch % d == 0]   # descending
    good = [d for d in divisors
            if aligned(d) and vmem_ok(d) and d * f_in <= lane_target
            and d <= infl_cap]
    if good:
        if prefer_multi_tile:
            multi = [d for d in good if d <= batch // 2]
            if multi:
                return multi[0]     # largest tile that still yields >=2 steps
        return good[0]
    # Inflation cap unreachable with lane-aligned tiles: smallest aligned tile
    # that fits VMEM minimizes wasted kron FLOPs.
    relaxed = [d for d in divisors if aligned(d) and vmem_ok(d)]
    if relaxed:
        return relaxed[-1]
    # Last resort (tiny problems): whole batch in one step; all blocks equal
    # the full arrays so the (8,128) rule is trivially satisfied.
    return batch


def _graph_filter_call(gso, x_slab, c_big, bias_sum, *, order, n_nodes, f_in,
                       f_out, batch, batch_tile, use_activation, add_bias,
                       vmem_limit_bytes, out_dtype):
    n_tiles = batch // batch_tile
    tap_width = batch_tile * f_in
    out_width = batch_tile * f_out
    single_step = n_tiles == 1

    kernel = functools.partial(_graph_filter_kernel, order=order,
                               tap_width=tap_width,
                               use_activation=use_activation,
                               add_bias=add_bias)

    def in_spec(shape, index_map, *, single_buffer):
        # Constant-index blocks (and everything on a 1-step grid) need only
        # one buffer; double-buffering them just burns VMEM.
        if single_buffer and _SINGLE_BUFFER_OK:
            return pl.BlockSpec(shape, index_map, pipeline_mode=pl.Buffered(1))
        return pl.BlockSpec(shape, index_map)

    in_specs = [
        in_spec((n_nodes, n_nodes), lambda t, *_: (0, 0),
                single_buffer=True),                                   # S
        in_spec((n_nodes, tap_width), lambda t, *_: (0, t),
                single_buffer=single_step),                            # X slab tile
        in_spec((order * tap_width, out_width), lambda t, *_: (0, 0),
                single_buffer=True),                                   # coeffs
    ]
    out_specs = pl.BlockSpec((n_nodes, out_width), lambda t, *_: (0, t))

    # Advisory cost (executed flops, incl. the bounded kron inflation).
    elem = x_slab.dtype.itemsize
    flops = (2 * (order - 1) * n_nodes * n_nodes * batch * f_in        # S@Z chain
             + 2 * order * n_nodes * batch * f_in * out_width)         # Theta mix
    bytes_accessed = (elem * (n_nodes * n_nodes + batch * n_nodes * f_in
                              + int(c_big.size))
                      + jnp.dtype(out_dtype).itemsize * batch * n_nodes * f_out)
    cost = (pl.CostEstimate(flops=flops, transcendentals=0,
                            bytes_accessed=bytes_accessed)
            if hasattr(pl, "CostEstimate") else None)

    args = ((bias_sum,) if add_bias else ()) + (gso, x_slab, c_big)
    return pl.pallas_call(
        kernel,
        out_shape=jax.ShapeDtypeStruct((n_nodes, batch * f_out), out_dtype),
        grid_spec=pltpu.PrefetchScalarGridSpec(
            num_scalar_prefetch=1 if add_bias else 0,   # bias only when used
            grid=(n_tiles,),                            # one program per batch tile
            in_specs=in_specs,
            out_specs=out_specs,
        ),
        compiler_params=pltpu.CompilerParams(
            dimension_semantics=("parallel",),
            vmem_limit_bytes=int(vmem_limit_bytes),
        ),
        cost_estimate=cost,
    )(*args)


def graph_filter_forward_slab(coefficients, gso, x_slab, bias, *, batch,
                              use_activation=True, use_bias=True,
                              compute_dtype=None, batch_tile=None):
    """Slab-layout forward: x_slab is (N, B*F_in), returns (N, B*F_out).

    Use this entry point directly for stacked GraphFilter layers to keep
    activations lane-folded and avoid per-layer HBM transposes.
    """
    order, f_in, f_out = coefficients.shape
    n_nodes, slab_w = x_slab.shape
    assert slab_w == batch * f_in
    out_dtype = x_slab.dtype

    vmem_cap, num_cores = _tpu_vmem_and_cores()
    vmem_limit = (vmem_cap * 3) // 4               # ~48 MiB v7x, ~96 MiB v5e/v6e
    prefer_multi = (num_cores >= 2) or (vmem_cap <= 64 * 1024 * 1024)

    if compute_dtype is not None:
        # bf16 MXU operands (f32 accumulation happens in-kernel). Loosen any
        # external tolerance when enabling this.
        gso = gso.astype(compute_dtype)
        x_slab = x_slab.astype(compute_dtype)
        coefficients = coefficients.astype(compute_dtype)

    if batch_tile is None:
        batch_tile = _pick_batch_tile(batch, n_nodes, f_in, f_out, order,
                                      vmem_budget=(vmem_limit * 7) // 8,
                                      prefer_multi_tile=prefer_multi)
    assert batch % batch_tile == 0

    # Block-diagonal coefficients kron(I_Bt, Theta_k), stacked over k, so one
    # GEMM per tap mixes every batch element of a tile.
    # TODO(synk): for very large Bt it is cheaper to emit the taps and do the
    # Theta mix as a dense (B*N, K*F_in) @ (K*F_in, F_out) einsum outside.
    eye = jnp.eye(batch_tile, dtype=coefficients.dtype)
    c_big = jnp.einsum("bc,kfg->kbfcg", eye, coefficients).reshape(
        order * batch_tile * f_in, batch_tile * f_out)

    add_bias = bool(use_bias)
    bias_sum = (jnp.sum(bias).reshape(1).astype(jnp.float32)
                if add_bias else None)

    return _graph_filter_call(gso, x_slab, c_big, bias_sum, order=order,
                              n_nodes=n_nodes, f_in=f_in, f_out=f_out,
                              batch=batch, batch_tile=batch_tile,
                              use_activation=use_activation,
                              add_bias=add_bias,
                              vmem_limit_bytes=vmem_limit,
                              out_dtype=out_dtype)


def graph_filter_forward(coefficients, gso, x, bias, *, use_activation=True,
                         use_bias=True, compute_dtype=None, batch_tile=None):
    """Pallas-backed GraphFilter forward.

    coefficients: (K, F_in, F_out); gso: (N, N); x: (B, N, F_in); bias: (K,)
    -> (B, N, F_out)
    """
    batch, n_nodes, f_in = x.shape
    f_out = coefficients.shape[2]
    # TODO(synk): stacked layers should stay in the slab layout
    # (graph_filter_forward_slab) to avoid these two HBM transpose passes.
    # TODO(synk): pad N to MXU granularity (128 v5e / 256 v6e,v7x) when N is
    # ragged and large enough for the padding FLOPs to pay off.
    x_slab = jnp.transpose(x, (1, 0, 2)).reshape(n_nodes, batch * f_in)
    y_slab = graph_filter_forward_slab(
        coefficients, gso, x_slab, bias, batch=batch,
        use_activation=use_activation, use_bias=use_bias,
        compute_dtype=compute_dtype, batch_tile=batch_tile)
    return jnp.transpose(y_slab.reshape(n_nodes, batch, f_out), (1, 0, 2))


def graph_filter_reference(coefficients, gso, x, bias, *, use_activation=True):
    """Pure-JAX reference matching the PyTorch filter_graph_signal semantics."""
    order = coefficients.shape[0]
    z = x
    out = jnp.zeros(x.shape[:2] + (coefficients.shape[2],), jnp.float32)
    for k in range(order):
        out = out + jnp.einsum('bnf,fg->bng', z, coefficients[k]) + bias[k]
        z = jnp.einsum('nm,bmf->bnf', gso, z)
    if use_activation:
        out = jnp.maximum(out, 0.0)
    return out


if __name__ == "__main__":
    # Small deterministic problem: order=3 taps, 16 nodes, 4 in-features,
    # 8 filters, batch=2.
    order, n_nodes, n_feat_in, n_filters, batch = 3, 16, 4, 8, 2

    key = jax.random.PRNGKey(0)
    k_gso, k_coef, k_x, k_bias = jax.random.split(key, 4)

    # Deterministic symmetric, spectrally-normalized graph shift operator.
    a = jax.random.uniform(k_gso, (n_nodes, n_nodes), dtype=jnp.float32)
    gso = (a + a.T) * 0.5
    gso = gso / jnp.linalg.norm(gso, ord=2)

    # reset_parameters(): uniform(-stdv, stdv) with stdv = 1/sqrt(order).
    stdv = 1.0 / math.sqrt(order)
    coefficients = jax.random.uniform(
        k_coef, (order, n_feat_in, n_filters), dtype=jnp.float32,
        minval=-stdv, maxval=stdv)

    x = jax.random.normal(k_x, (batch, n_nodes, n_feat_in), dtype=jnp.float32)

    # Case 1: use_bias=False (module default), use_activation=True (ReLU).
    bias0 = jnp.zeros((order,), dtype=jnp.float32)
    y = graph_filter_forward(coefficients, gso, x, bias0,
                             use_activation=True, use_bias=False)
    y = jax.block_until_ready(y)
    y_ref = graph_filter_reference(coefficients, gso, x, bias0,
                                   use_activation=True)
    assert y.shape == (batch, n_nodes, n_filters)
    assert bool(jnp.allclose(y, y_ref, atol=1e-5, rtol=1e-5)), "mismatch (no bias)"

    # Case 2: use_bias=True path (validates the hoisted-bias sum), no ReLU.
    bias1 = jax.random.uniform(k_bias, (order,), dtype=jnp.float32)
    y2 = graph_filter_forward(coefficients, gso, x, bias1,
                              use_activation=False, use_bias=True)
    y2 = jax.block_until_ready(y2)
    y2_ref = graph_filter_reference(coefficients, gso, x, bias1,
                                    use_activation=False)
    assert bool(jnp.allclose(y2, y2_ref, atol=1e-5, rtol=1e-5)), "mismatch (bias)"

    print("KERNEL_OK")
</pallas_src>

<mosaic_0001>
module attributes {stable_mosaic.version = 11 : i64} {
  func.func @_graph_filter_kernel(%arg0: i32, %arg1: memref<16x16xf32, #tpu.memory_space<vmem>>, %arg2: memref<16x8xf32, #tpu.memory_space<vmem>>, %arg3: memref<24x16xf32, #tpu.memory_space<vmem>>, %arg4: memref<16x16xf32, #tpu.memory_space<vmem>>) attributes {dimension_semantics = [#tpu.dimension_semantics<parallel>], iteration_bounds = array<i64: 1>, scalar_prefetch = 0 : i64, scratch_operands = 0 : i64, tpu.core_type = #tpu.core_type<tc>, window_params = [{pipeline_mode = #tpu.pipeline_mode<synchronous>, transform_indices = @transform_0, window_bounds = array<i64: 16, 16>}, {pipeline_mode = #tpu.pipeline_mode<synchronous>, transform_indices = @transform_1, window_bounds = array<i64: 16, 8>}, {pipeline_mode = #tpu.pipeline_mode<synchronous>, transform_indices = @transform_2, window_bounds = array<i64: 24, 16>}, {transform_indices = @transform_3, window_bounds = array<i64: 16, 16>}]} {
    %c0 = arith.constant 0 : index
    %c0_0 = arith.constant 0 : index
    %0 = vector.load %arg1[%c0, %c0_0] : memref<16x16xf32, #tpu.memory_space<vmem>>, vector<16x16xf32>
    %c0_1 = arith.constant 0 : index
    %c0_2 = arith.constant 0 : index
    %1 = vector.load %arg2[%c0_1, %c0_2] : memref<16x8xf32, #tpu.memory_space<vmem>>, vector<16x8xf32>
    %c0_3 = arith.constant 0 : index
    %c0_4 = arith.constant 0 : index
    %2 = vector.load %arg3[%c0_3, %c0_4] : memref<24x16xf32, #tpu.memory_space<vmem>>, vector<8x16xf32>
    %cst = arith.constant dense<0.000000e+00> : vector<16x16xf32>
    %3 = tpu.matmul %1, %2, %cst {dimension_numbers = #tpu.dot_dimension_numbers<[1], [0], [0], [1], [0, 0, 1, 1], [], []>} : vector<16x8xf32>, vector<8x16xf32>, vector<16x16xf32> -> vector<16x16xf32>
    %cst_5 = arith.constant dense<0.000000e+00> : vector<16x8xf32>
    %4 = tpu.matmul %0, %1, %cst_5 {dimension_numbers = #tpu.dot_dimension_numbers<[1], [0], [0], [1], [0, 0, 1, 1], [], []>} : vector<16x16xf32>, vector<16x8xf32>, vector<16x8xf32> -> vector<16x8xf32>
    %c8 = arith.constant 8 : index
    %c0_6 = arith.constant 0 : index
    %5 = vector.load %arg3[%c8, %c0_6] : memref<24x16xf32, #tpu.memory_space<vmem>>, vector<8x16xf32>
    %cst_7 = arith.constant dense<0.000000e+00> : vector<16x16xf32>
    %6 = tpu.matmul %4, %5, %cst_7 {dimension_numbers = #tpu.dot_dimension_numbers<[1], [0], [0], [1], [0, 0, 1, 1], [], []>} : vector<16x8xf32>, vector<8x16xf32>, vector<16x16xf32> -> vector<16x16xf32>
    %7 = arith.addf %3, %6 : vector<16x16xf32>
    %cst_8 = arith.constant dense<0.000000e+00> : vector<16x8xf32>
    %8 = tpu.matmul %0, %4, %cst_8 {dimension_numbers = #tpu.dot_dimension_numbers<[1], [0], [0], [1], [0, 0, 1, 1], [], []>} : vector<16x16xf32>, vector<16x8xf32>, vector<16x8xf32> -> vector<16x8xf32>
    %c16 = arith.constant 16 : index
    %c0_9 = arith.constant 0 : index
    %9 = vector.load %arg3[%c16, %c0_9] : memref<24x16xf32, #tpu.memory_space<vmem>>, vector<8x16xf32>
    %cst_10 = arith.constant dense<0.000000e+00> : vector<16x16xf32>
    %10 = tpu.matmul %8, %9, %cst_10 {dimension_numbers = #tpu.dot_dimension_numbers<[1], [0], [0], [1], [0, 0, 1, 1], [], []>} : vector<16x8xf32>, vector<8x16xf32>, vector<16x16xf32> -> vector<16x16xf32>
    %11 = arith.addf %7, %10 : vector<16x16xf32>
    %cst_11 = arith.constant 0.000000e+00 : f32
    %12 = vector.broadcast %cst_11 : f32 to vector<16x16xf32>
    %13 = arith.maximumf %11, %12 : vector<16x16xf32>
    %c0_12 = arith.constant 0 : index
    %c0_13 = arith.constant 0 : index
    %14 = vector.load %arg4[%c0_12, %c0_13] : memref<16x16xf32, #tpu.memory_space<vmem>>, vector<16x16xf32>
    tpu.vector_store %arg4[%c0_12, %c0_13], %13 {strides = array<i32>} : memref<16x16xf32, #tpu.memory_space<vmem>>, vector<16x16xf32>,
    return
  }
  func.func @transform_0(%arg0: i32) -> (i32, i32) {
    %c0_i32 = arith.constant 0 : i32
    %c0_i32_0 = arith.constant 0 : i32
    %c0_i32_1 = arith.constant 0 : i32
    return %c0_i32, %c0_i32_0 : i32, i32
  }
  func.func @transform_1(%arg0: i32) -> (i32, i32) {
    %c0_i32 = arith.constant 0 : i32
    %c0_i32_0 = arith.constant 0 : i32
    return %c0_i32, %arg0 : i32, i32
  }
  func.func @transform_2(%arg0: i32) -> (i32, i32) {
    %c0_i32 = arith.constant 0 : i32
    %c0_i32_0 = arith.constant 0 : i32
    %c0_i32_1 = arith.constant 0 : i32
    return %c0_i32, %c0_i32_0 : i32, i32
  }
  func.func @transform_3(%arg0: i32) -> (i32, i32) {
    %c0_i32 = arith.constant 0 : i32
    %c0_i32_0 = arith.constant 0 : i32
    return %c0_i32, %arg0 : i32, i32
  }
}

</mosaic_0001>

<llo_original>
// kernel: tpu_custom_call.1
$region0: #{tpu_custom_call.1}
  #allocation0 [shape = 'u32[]', space=smem, size = 0x4, offset = 0x4, fixed_abs, tag = 'smem constant byte address 0x4 - core index']
  #allocation1 [shape = 'u32[72,128]{1,0:T(1,128)}', space=vmem, size = 0x9000, scoped, tag = 'internal scratch']
  %s0 = inlined_call_operand.vmem [shape: f32[16,16], index: 0, kind: input, shape index: {}]
  %s1 = inlined_call_operand.vmem [shape: f32[16,8], index: 1, kind: input, shape index: {}]
  %s2 = inlined_call_operand.vmem [shape: f32[24,16], index: 2, kind: input, shape index: {}]
  %s3 = inlined_call_operand.hbm [shape: f32[16,16], index: 3, kind: output, shape index: {}]
  %s4 = sld [smem:[#allocation0]]
  $region22: #{tpu_custom_call.1} parent=0
    _
  %s6 = ssub.s32 1, %s4
  %s7 = scalar_select 0, %s6, %s4
  $region1: #{tpu_custom_call.1} parent=0
    #allocation2 [shape = 'u8[8192]{0}', space=vmem, size = 0x2000, scoped, tag = 'output window, operand 0, single buffered']
    #allocation3 [shape = 's32[1]{0}', space=sflag, size = 0x4, scoped, tag = 'scoped memory for tpu_custom_call.1']
    %8 = vsyncpa [#allocation3], 0
    // Predicated region
    $region2: #{tpu_custom_call.1} parent=1 // pred_check
      _
    $region3: #{tpu_custom_call.1} parent=1 // pred_check_branch
      %10 = sbr.rel (0) target = $region5
    $region4: #{tpu_custom_call.1} parent=1 // pred_region
      _
    $region5: #{tpu_custom_call.1} parent=1 // pred_fallthru
      _
    // Predicated region
    $region6: #{tpu_custom_call.1} parent=1 // pred_check
      _
    $region7: #{tpu_custom_call.1} parent=1 // pred_check_branch
      %12 = sbr.rel (0) target = $region9
    $region8: #{tpu_custom_call.1} parent=1 // pred_region
      _
    $region9: #{tpu_custom_call.1} parent=1 // pred_fallthru
      _
    // Predicated region
    $region10: #{tpu_custom_call.1} parent=1 // pred_check
      _
    $region11: #{tpu_custom_call.1} parent=1 // pred_check_branch
      %14 = sbr.rel (0) target = $region13
    $region12: #{tpu_custom_call.1} parent=1 // pred_region
      _
    $region13: #{tpu_custom_call.1} parent=1 // pred_fallthru
      _
    %v15 = vld [vmem:[%s0] sm:$0xff]
    %v16 = vld [vmem:[%s0 + $0x8] sm:$0xff]
    %v17 = vld [vmem:[%s1] sm:$0xff]
    %v18 = vld [vmem:[%s1 + $0x8] sm:$0xff]
    %v19 = vld [vmem:[%s2] sm:$0xff]
    %vm20 = vcmask 130048
    %v22 = vsel %vm20, %v15, 0
    %v25 = vsel %vm20, %v16, 0
    %27 = vmatpush.msra.mxu0 0.0
    %28 = vmatpush.msra.mxu0 0.0
    %29 = vmatpush.msra.mxu0 0.0
    %30 = vmatpush.msra.mxu0 0.0
    %31 = vmatpush.msra.mxu0 0.0
    %32 = vmatpush.msra.mxu0 0.0
    %33 = vmatpush.msra.mxu0 0.0
    %34 = vmatpush.msra.mxu0 0.0
    %35 = vmatpush.msra.mxu0 0.0
    %36 = vmatpush.msra.mxu0 0.0
    %37 = vmatpush.msra.mxu0 0.0
    %38 = vmatpush.msra.mxu0 0.0
    %39 = vmatpush.msra.mxu0 0.0
    %40 = vmatpush.msra.mxu0 0.0
    %41 = vmatpush.msra.mxu0 %v18
    %42 = vmatpush.msra.mxu0 %v17
    %43 = vmatmul.f32.gmra.mxu0 %v22
    %v44 = vpop.f32.mrf.mxu0
    %v45 = vadd.f32 0.0, %v44
    %46 = vmatmul.f32.gmra.mxu0 %v25
    %v47 = vpop.f32.mrf.mxu0
    %v48 = vadd.f32 0.0, %v47
    %49 = vdwg.mxu0
    %v50 = vld [vmem:[%s2 + $0x8] sm:$0xff]
    %vm51 = vcmask 64512
    %v53 = vsel %vm51, %v45, 0
    %v56 = vsel %vm51, %v48, 0
    %58 = vmatpush.msra.mxu0 0.0
    %59 = vmatpush.msra.mxu0 0.0
    %60 = vmatpush.msra.mxu0 0.0
    %61 = vmatpush.msra.mxu0 0.0
    %62 = vmatpush.msra.mxu0 0.0
    %63 = vmatpush.msra.mxu0 0.0
    %64 = vmatpush.msra.mxu0 0.0
    %65 = vmatpush.msra.mxu0 0.0
    %66 = vmatpush.msra.mxu0 0.0
    %67 = vmatpush.msra.mxu0 0.0
    %68 = vmatpush.msra.mxu0 0.0
    %69 = vmatpush.msra.mxu0 0.0
    %70 = vmatpush.msra.mxu0 0.0
    %71 = vmatpush.msra.mxu0 0.0
    %72 = vmatpush.msra.mxu0 0.0
    %73 = vmatpush.msra.mxu0 %v50
    %74 = vmatmul.f32.gmra.mxu0 %v53
    %v75 = vpop.f32.mrf.mxu0
    %v76 = vadd.f32 0.0, %v75
    %77 = vmatmul.f32.gmra.mxu0 %v56
    %v78 = vpop.f32.mrf.mxu0
    %v79 = vadd.f32 0.0, %v78
    %80 = vdwg.mxu0
    %v82 = vsel %vm51, %v17, 0
    %v85 = vsel %vm51, %v18, 0
    %87 = vmatpush.msra.mxu0 0.0
    %88 = vmatpush.msra.mxu0 0.0
    %89 = vmatpush.msra.mxu0 0.0
    %90 = vmatpush.msra.mxu0 0.0
    %91 = vmatpush.msra.mxu0 0.0
    %92 = vmatpush.msra.mxu0 0.0
    %93 = vmatpush.msra.mxu0 0.0
    %94 = vmatpush.msra.mxu0 0.0
    %95 = vmatpush.msra.mxu0 0.0
    %96 = vmatpush.msra.mxu0 0.0
    %97 = vmatpush.msra.mxu0 0.0
    %98 = vmatpush.msra.mxu0 0.0
    %99 = vmatpush.msra.mxu0 0.0
    %100 = vmatpush.msra.mxu0 0.0
    %101 = vmatpush.msra.mxu0 0.0
    %102 = vmatpush.msra.mxu0 %v19
    %103 = vmatmul.f32.gmra.mxu0 %v82
    %v104 = vpop.f32.mrf.mxu0
    %v105 = vadd.f32 %v76, %v104
    %106 = vmatmul.f32.gmra.mxu0 %v85
    %v107 = vpop.f32.mrf.mxu0
    %v108 = vadd.f32 %v79, %v107
    %109 = vdwg.mxu0
    %110 = vmatpush.msra.mxu0 0.0
    %111 = vmatpush.msra.mxu0 0.0
    %112 = vmatpush.msra.mxu0 0.0
    %113 = vmatpush.msra.mxu0 0.0
    %114 = vmatpush.msra.mxu0 0.0
    %115 = vmatpush.msra.mxu0 0.0
    %116 = vmatpush.msra.mxu0 0.0
    %117 = vmatpush.msra.mxu0 0.0
    %118 = vmatpush.msra.mxu0 0.0
    %119 = vmatpush.msra.mxu0 0.0
    %120 = vmatpush.msra.mxu0 0.0
    %121 = vmatpush.msra.mxu0 0.0
    %122 = vmatpush.msra.mxu0 0.0
    %123 = vmatpush.msra.mxu0 0.0
    %124 = vmatpush.msra.mxu0 %v48
    %125 = vmatpush.msra.mxu0 %v45
    %126 = vmatmul.f32.gmra.mxu0 %v22
    %v127 = vpop.f32.mrf.mxu0
    %v128 = vadd.f32 0.0, %v127
    %129 = vmatmul.f32.gmra.mxu0 %v25
    %v130 = vpop.f32.mrf.mxu0
    %v131 = vadd.f32 0.0, %v130
    %132 = vdwg.mxu0
    %v133 = vld [vmem:[%s2 + $0x10] sm:$0xff]
    %v135 = vsel %vm51, %v128, 0
    %v138 = vsel %vm51, %v131, 0
    %140 = vmatpush.msra.mxu0 0.0
    %141 = vmatpush.msra.mxu0 0.0
    %142 = vmatpush.msra.mxu0 0.0
    %143 = vmatpush.msra.mxu0 0.0
    %144 = vmatpush.msra.mxu0 0.0
    %145 = vmatpush.msra.mxu0 0.0
    %146 = vmatpush.msra.mxu0 0.0
    %147 = vmatpush.msra.mxu0 0.0
    %148 = vmatpush.msra.mxu0 0.0
    %149 = vmatpush.msra.mxu0 0.0
    %150 = vmatpush.msra.mxu0 0.0
    %151 = vmatpush.msra.mxu0 0.0
    %152 = vmatpush.msra.mxu0 0.0
    %153 = vmatpush.msra.mxu0 0.0
    %154 = vmatpush.msra.mxu0 0.0
    %155 = vmatpush.msra.mxu0 %v133
    %156 = vmatmul.f32.gmra.mxu0 %v135
    %v157 = vpop.f32.mrf.mxu0
    %v158 = vadd.f32 0.0, %v157
    %159 = vmatmul.f32.gmra.mxu0 %v138
    %v160 = vpop.f32.mrf.mxu0
    %v161 = vadd.f32 0.0, %v160
    %162 = vdwg.mxu0
    %v163 = vadd.f32 %v105, %v158
    %v164 = vadd.f32 %v108, %v161
    %v165 = vmax.f32 %v163, 0.0
    %v166 = vmax.f32 %v164, 0.0
    %167 = vst.msk [vmem:[#allocation2] sm:$0xff] %vm20, %v165
    %168 = vst.msk [vmem:[#allocation2 + $0x8] sm:$0xff] %vm20, %v166
    // Predicated region
    $region14: #{tpu_custom_call.1} parent=1 // pred_check
      _
    $region15: #{tpu_custom_call.1} parent=1 // pred_check_branch
      %170 = sbr.rel (0) target = $region17
    $region16: #{tpu_custom_call.1} parent=1 // pred_region
      %172 = vsyncadd [#allocation3], 0
      %s173 = sshll.u32 [#allocation2], 4
      %s174 = int_to_ptr.vmem [resolvable:$true] %s173
      %s175 = sshll.u32 %s3, 4
      %s176 = int_to_ptr.hbm [resolvable:$true] %s175
      %181 = dma.vmem_to_hbm [thread:$0]  %s174, 256, %s176, [#allocation3], 128, 128, 8
    $region17: #{tpu_custom_call.1} parent=1 // pred_fallthru
      _
    // Predicated region
    $region18: #{tpu_custom_call.1} parent=1 // pred_check
      _
    $region19: #{tpu_custom_call.1} parent=1 // pred_check_branch
      %183 = sbr.rel (0) target = $region21
    $region20: #{tpu_custom_call.1} parent=1 // pred_region
      %185 = dma.done [#allocation3], 256
    $region21: #{tpu_custom_call.1} parent=1 // pred_fallthru
      _
    %186 = vsyncpa [#allocation3], 1

</llo_original>
